<compile_context>
chip_gen: v7x
topology: tpu7x:2x2x1
jax: 0.10.0
libtpu: 0.0.40
codegen_flags: <defaults>
</compile_context>

<pallas_src>
import jax
import jax.numpy as jnp
from jax.experimental import pallas as pl
from jax.experimental.pallas import tpu as pltpu


def _round_up(a: int, b: int) -> int:
    return (a + b - 1) // b * b


def _avg_pool_kernel(x_ref, p_ref, o_ref):
    """One grid step: (bt, Lin) @ (Lin, Lout) pooling matmul on the MXU.

    x_ref: (bt, Lin)   input rows, Lin = G*4*Wo (lane-dense)
    p_ref: (Lin, Lout) resident pooling matrix, bf16, entries in {0, 0.25}
    o_ref: (bt, Lout)  pooled rows, Lout = G*Wo
    """
    x = x_ref[...]
    p = p_ref[...]
    if x.dtype == jnp.bfloat16:
        # bf16 x bf16 -> f32 accumulate on the MXU is exact w.r.t. the inputs.
        acc = jnp.dot(x, p, preferred_element_type=jnp.float32)
    else:
        # Exact f32 path: x == hi + mid + lo to within ~2^-25 relative, each
        # component is bf16, and the pooling weights (0.25) are exact in bf16,
        # so three bf16 matmuls reproduce the f32 average to f32 roundoff.
        xf = x.astype(jnp.float32)
        hi = xf.astype(jnp.bfloat16)
        r1 = xf - hi.astype(jnp.float32)
        mid = r1.astype(jnp.bfloat16)
        lo = (r1 - mid.astype(jnp.float32)).astype(jnp.bfloat16)
        acc = jnp.dot(hi, p, preferred_element_type=jnp.float32)
        acc = acc + jnp.dot(mid, p, preferred_element_type=jnp.float32)
        acc = acc + jnp.dot(lo, p, preferred_element_type=jnp.float32)
    o_ref[...] = acc.astype(o_ref.dtype)


@jax.jit
def transition_forward(x: jnp.ndarray) -> jnp.ndarray:
    """AvgPool2d(kernel_size=2, stride=2) on NCHW input via a Pallas TPU kernel."""
    N, C, H, W = x.shape
    Ho, Wo = H // 2, W // 2
    if N == 0 or C == 0 or Ho == 0 or Wo == 0:
        return jnp.zeros((N, C, Ho, Wo), x.dtype)

    # Crop odd trailing row/col (matches PyTorch AvgPool2d ceil_mode=False).
    if H != 2 * Ho or W != 2 * Wo:
        x = x[:, :, : 2 * Ho, : 2 * Wo]

    rows = N * C * Ho

    # Fold G output rows into the lane axis so the input block is G*4*Wo lanes
    # wide and the output block G*Wo lanes wide (lane-dense in/out).  Cap the
    # contraction width at ~256 lanes so the MXU work stays far below the HBM
    # roofline crossing even on v5e (kernel remains purely HBM-bound).
    g_cap = max(1, 256 // (4 * Wo))
    G = 1
    for g in range(min(g_cap, rows), 0, -1):
        if rows % g == 0:
            G = g
            break
    rows2 = rows // G
    lin = G * 4 * Wo
    lout = G * Wo

    # Transpose-free layout: a pure contiguous reshape, no HBM round-trip.
    x_r = x.reshape(rows2, lin)

    # Pooling matrix (built once, tiny, stays resident in VMEM): input lane
    # l = g*4Wo + s*2Wo + 2k + t  contributes with weight 0.25 to output lane
    # g*Wo + k  (s = H-pair index, t = W-pair index).
    l = jnp.arange(lin)
    dst = (l // (4 * Wo)) * Wo + (l % (2 * Wo)) // 2
    pool_mat = jnp.where(dst[:, None] == jnp.arange(lout)[None, :], 0.25, 0.0)
    pool_mat = pool_mat.astype(jnp.bfloat16)  # 0.25 is exact in bf16

    # ---- Block sizing: dtype-aware padding, v7x-safe VMEM budget ----
    itemsize = x.dtype.itemsize
    sub = max(8, 32 // itemsize)            # sublane tile: 8 f32 / 16 bf16 / 32 int8
    in_row = _round_up(lin, 128) * itemsize
    out_row = _round_up(lout, 128) * itemsize
    work_row = 3 * in_row + 2 * out_row     # in-kernel temporaries (bf16 splits, f32 acc)
    per_row = 2 * (in_row + out_row) + work_row   # double-buffered blocks + temps
    vmem_budget = 12 * 1024 * 1024          # per-kernel budget; safe on v7x's 64 MiB VMEM
    bt_cap = max(sub, (vmem_budget // per_row) // sub * sub)

    if rows2 <= sub:
        bt = rows2                          # block dim == full dim (always legal)
    else:
        # Aim for >= 8 grid steps so the pipeline has real overlap and both
        # v7x TensorCores get work; never exceed the VMEM cap.
        bt_target = _round_up(pl.cdiv(rows2, 8), sub)
        bt = max(sub, min(bt_cap, bt_target))
        if bt >= rows2:
            bt = rows2
    num_blocks = pl.cdiv(rows2, bt)

    out_flat = pl.pallas_call(
        _avg_pool_kernel,
        out_shape=jax.ShapeDtypeStruct((rows2, lout), x.dtype),
        grid=(num_blocks,),
        in_specs=[
            pl.BlockSpec((bt, lin), lambda i: (i, 0)),
            pl.BlockSpec((lin, lout), lambda i: (0, 0)),   # resident pooling matrix
        ],
        out_specs=pl.BlockSpec((bt, lout), lambda i: (i, 0)),
        compiler_params=pltpu.CompilerParams(
            dimension_semantics=("parallel",),
            vmem_limit_bytes=32 * 1024 * 1024,
        ),
    )(x_r, pool_mat)

    # Free reshape back to NCHW output.
    return out_flat.reshape(N, C, Ho, Wo)


def _ref_avg_pool(x: jnp.ndarray) -> jnp.ndarray:
    """Plain-JAX reference: 2x2/2 average pool (ceil_mode=False) in f32."""
    N, C, H, W = x.shape
    Ho, Wo = H // 2, W // 2
    xc = x[:, :, : 2 * Ho, : 2 * Wo].astype(jnp.float32)
    return xc.reshape(N, C, Ho, 2, Wo, 2).mean(axis=(3, 5))


if __name__ == "__main__":
    k0, k1, k2 = jax.random.split(jax.random.PRNGKey(0), 3)

    # Primary check: f32, even spatial dims.
    x = jax.random.normal(k0, (2, 4, 16, 16), dtype=jnp.float32)
    out = jax.block_until_ready(transition_forward(x))
    assert out.shape == (2, 4, 8, 8), out.shape
    assert jnp.allclose(out, _ref_avg_pool(x), atol=1e-5, rtol=1e-5)

    # Odd spatial dims (exercises cropping + non-128-multiple lane widths).
    x_odd = jax.random.normal(k1, (2, 4, 23, 11), dtype=jnp.float32)
    out_odd = jax.block_until_ready(transition_forward(x_odd))
    assert out_odd.shape == (2, 4, 11, 5), out_odd.shape
    assert jnp.allclose(out_odd, _ref_avg_pool(x_odd), atol=1e-5, rtol=1e-5)

    # bf16 path (single-matmul branch).
    x_bf = jax.random.normal(k2, (2, 4, 16, 16), dtype=jnp.bfloat16)
    out_bf = jax.block_until_ready(transition_forward(x_bf))
    assert out_bf.shape == (2, 4, 8, 8), out_bf.shape
    assert jnp.allclose(out_bf.astype(jnp.float32), _ref_avg_pool(x_bf),
                        atol=2e-2, rtol=2e-2)

    print("KERNEL_OK")
</pallas_src>

<mosaic_0001>
module attributes {stable_mosaic.version = 11 : i64} {
  func.func @_avg_pool_kernel(%arg0: i32, %arg1: memref<8x256xf32, #tpu.memory_space<vmem>>, %arg2: memref<256x64xbf16, #tpu.memory_space<vmem>>, %arg3: memref<8x64xf32, #tpu.memory_space<vmem>>) attributes {dimension_semantics = [#tpu.dimension_semantics<parallel>], iteration_bounds = array<i64: 1>, scalar_prefetch = 0 : i64, scratch_operands = 0 : i64, tpu.core_type = #tpu.core_type<tc>, window_params = [{transform_indices = @transform_0, window_bounds = array<i64: 8, 256>}, {pipeline_mode = #tpu.pipeline_mode<synchronous>, transform_indices = @transform_1, window_bounds = array<i64: 256, 64>}, {transform_indices = @transform_2, window_bounds = array<i64: 8, 64>}]} {
    %c0 = arith.constant 0 : index
    %c0_0 = arith.constant 0 : index
    %0 = vector.load %arg1[%c0, %c0_0] : memref<8x256xf32, #tpu.memory_space<vmem>>, vector<8x256xf32>
    %c0_1 = arith.constant 0 : index
    %c0_2 = arith.constant 0 : index
    %1 = vector.load %arg2[%c0_1, %c0_2] : memref<256x64xbf16, #tpu.memory_space<vmem>>, vector<256x64xbf16>
    %2 = arith.truncf %0 : vector<8x256xf32> to vector<8x256xbf16>
    %3 = arith.extf %2 : vector<8x256xbf16> to vector<8x256xf32>
    %4 = arith.subf %0, %3 : vector<8x256xf32>
    %5 = arith.truncf %4 : vector<8x256xf32> to vector<8x256xbf16>
    %6 = arith.extf %5 : vector<8x256xbf16> to vector<8x256xf32>
    %7 = arith.subf %4, %6 : vector<8x256xf32>
    %8 = arith.truncf %7 : vector<8x256xf32> to vector<8x256xbf16>
    %cst = arith.constant dense<0.000000e+00> : vector<8x64xf32>
    %9 = tpu.matmul %2, %1, %cst {dimension_numbers = #tpu.dot_dimension_numbers<[1], [0], [0], [1], [0, 0, 1, 1], [], []>} : vector<8x256xbf16>, vector<256x64xbf16>, vector<8x64xf32> -> vector<8x64xf32>
    %cst_3 = arith.constant dense<0.000000e+00> : vector<8x64xf32>
    %10 = tpu.matmul %5, %1, %cst_3 {dimension_numbers = #tpu.dot_dimension_numbers<[1], [0], [0], [1], [0, 0, 1, 1], [], []>} : vector<8x256xbf16>, vector<256x64xbf16>, vector<8x64xf32> -> vector<8x64xf32>
    %11 = arith.addf %9, %10 : vector<8x64xf32>
    %cst_4 = arith.constant dense<0.000000e+00> : vector<8x64xf32>
    %12 = tpu.matmul %8, %1, %cst_4 {dimension_numbers = #tpu.dot_dimension_numbers<[1], [0], [0], [1], [0, 0, 1, 1], [], []>} : vector<8x256xbf16>, vector<256x64xbf16>, vector<8x64xf32> -> vector<8x64xf32>
    %13 = arith.addf %11, %12 : vector<8x64xf32>
    %c0_5 = arith.constant 0 : index
    %c0_6 = arith.constant 0 : index
    %14 = vector.load %arg3[%c0_5, %c0_6] : memref<8x64xf32, #tpu.memory_space<vmem>>, vector<8x64xf32>
    tpu.vector_store %arg3[%c0_5, %c0_6], %13 {strides = array<i32>} : memref<8x64xf32, #tpu.memory_space<vmem>>, vector<8x64xf32>,
    return
  }
  func.func @transform_0(%arg0: i32) -> (i32, i32) {
    %c0_i32 = arith.constant 0 : i32
    %c0_i32_0 = arith.constant 0 : i32
    return %arg0, %c0_i32 : i32, i32
  }
  func.func @transform_1(%arg0: i32) -> (i32, i32) {
    %c0_i32 = arith.constant 0 : i32
    %c0_i32_0 = arith.constant 0 : i32
    %c0_i32_1 = arith.constant 0 : i32
    return %c0_i32, %c0_i32_0 : i32, i32
  }
  func.func @transform_2(%arg0: i32) -> (i32, i32) {
    %c0_i32 = arith.constant 0 : i32
    %c0_i32_0 = arith.constant 0 : i32
    return %arg0, %c0_i32 : i32, i32
  }
}

</mosaic_0001>

<llo_original>
// kernel: transition_forward.1
$region0: #{transition_forward.1}
  #allocation0 [shape = 'u32[]', space=smem, size = 0x4, offset = 0x4, fixed_abs, tag = 'smem constant byte address 0x4 - core index']
  #allocation1 [shape = 'u32[144,128]{1,0:T(1,128)}', space=vmem, size = 0x12000, scoped, tag = 'internal scratch']
  %s0 = inlined_call_operand.vmem [shape: f32[8,256], index: 0, kind: input, shape index: {}]
  %s1 = inlined_call_operand.vmem [shape: bf16[256,64], index: 1, kind: input, shape index: {}]
  %s2 = inlined_call_operand.vmem [shape: f32[8,64], index: 2, kind: output, shape index: {}]
  %s3 = sld [smem:[#allocation0]]
  $region18: #{transition_forward.1} parent=0
    _
  %s5 = ssub.s32 1, %s3
  %s6 = scalar_select 0, %s5, %s3
  // Predicated region
  $region2: #{transition_forward.1} parent=0 // pred_check
    _
  $region3: #{transition_forward.1} parent=0 // pred_check_branch
    %8 = sbr.rel (0) target = $region5
  $region4: #{transition_forward.1} parent=0 // pred_region
    _
  $region5: #{transition_forward.1} parent=0 // pred_fallthru
    _
  // Predicated region
  $region6: #{transition_forward.1} parent=0 // pred_check
    _
  $region7: #{transition_forward.1} parent=0 // pred_check_branch
    %10 = sbr.rel (0) target = $region9
  $region8: #{transition_forward.1} parent=0 // pred_region
    _
  $region9: #{transition_forward.1} parent=0 // pred_fallthru
    _
  %v12 = vld [vmem:[%s0] sm:$0xff]
  %v13 = vld [vmem:[%s0 + $0x8] sm:$0xff]
  %v14 = vld [vmem:[%s1] sm:$0xf]
  %v15 = vld [vmem:[%s1 + $0x4] sm:$0xf]
  %v16 = vld [vmem:[%s1 + $0x8] sm:$0xf]
  %v17 = vld [vmem:[%s1 + $0xc] sm:$0xf]
  %v18 = vld [vmem:[%s1 + $0x10] sm:$0xf]
  %v19 = vld [vmem:[%s1 + $0x14] sm:$0xf]
  %v20 = vld [vmem:[%s1 + $0x18] sm:$0xf]
  %v21 = vld [vmem:[%s1 + $0x1c] sm:$0xf]
  %v22 = vld [vmem:[%s1 + $0x20] sm:$0xf]
  %v23 = vld [vmem:[%s1 + $0x24] sm:$0xf]
  %v24 = vld [vmem:[%s1 + $0x28] sm:$0xf]
  %v25 = vld [vmem:[%s1 + $0x2c] sm:$0xf]
  %v26 = vld [vmem:[%s1 + $0x30] sm:$0xf]
  %v27 = vld [vmem:[%s1 + $0x34] sm:$0xf]
  %v28 = vld [vmem:[%s1 + $0x38] sm:$0xf]
  %v29 = vld [vmem:[%s1 + $0x3c] sm:$0xf]
  %v30 = vld [vmem:[%s1 + $0x40] sm:$0xf]
  %v31 = vld [vmem:[%s1 + $0x44] sm:$0xf]
  %v32 = vld [vmem:[%s1 + $0x48] sm:$0xf]
  %v33 = vld [vmem:[%s1 + $0x4c] sm:$0xf]
  %v34 = vld [vmem:[%s1 + $0x50] sm:$0xf]
  %v35 = vld [vmem:[%s1 + $0x54] sm:$0xf]
  %v36 = vld [vmem:[%s1 + $0x58] sm:$0xf]
  %v37 = vld [vmem:[%s1 + $0x5c] sm:$0xf]
  %v38 = vld [vmem:[%s1 + $0x60] sm:$0xf]
  %v39 = vld [vmem:[%s1 + $0x64] sm:$0xf]
  %v40 = vld [vmem:[%s1 + $0x68] sm:$0xf]
  %v41 = vld [vmem:[%s1 + $0x6c] sm:$0xf]
  %v42 = vld [vmem:[%s1 + $0x70] sm:$0xf]
  %v43 = vld [vmem:[%s1 + $0x74] sm:$0xf]
  %v44 = vld [vmem:[%s1 + $0x78] sm:$0xf]
  %v45 = vld [vmem:[%s1 + $0x7c] sm:$0xf]
  %v46 = vpack.c.bf16 %v12, %v12
  %v47 = vpack.c.bf16 %v13, %v13
  %v48 = vunpack.c.l.bf16 %v46
  %v49 = vunpack.c.l.bf16 %v47
  %v50 = vsub.f32 %v12, %v48
  %v51 = vsub.f32 %v13, %v49
  %v52 = vpack.c.bf16 %v50, %v50
  %v53 = vpack.c.bf16 %v51, %v51
  %v54 = vunpack.c.l.bf16 %v52
  %v55 = vunpack.c.l.bf16 %v53
  %v56 = vsub.f32 %v50, %v54
  %v57 = vsub.f32 %v51, %v55
  %v58 = vpack.c.bf16 %v56, %v56
  %v59 = vpack.c.bf16 %v57, %v57
  %v92 = vunpack.c.l.b16 %v14
  %v93 = vunpack.c.l.b16 %v15
  %v94 = vunpack.c.l.b16 %v16
  %v95 = vunpack.c.l.b16 %v17
  %v96 = vunpack.c.l.b16 %v18
  %v97 = vunpack.c.l.b16 %v19
  %v98 = vunpack.c.l.b16 %v20
  %v99 = vunpack.c.l.b16 %v21
  %v100 = vunpack.c.l.b16 %v22
  %v101 = vunpack.c.l.b16 %v23
  %v102 = vunpack.c.l.b16 %v24
  %v103 = vunpack.c.l.b16 %v25
  %v104 = vunpack.c.l.b16 %v26
  %v105 = vunpack.c.l.b16 %v27
  %v106 = vunpack.c.l.b16 %v28
  %v107 = vunpack.c.l.b16 %v29
  %v108 = vunpack.c.l.b16 %v30
  %v109 = vunpack.c.l.b16 %v31
  %v110 = vunpack.c.l.b16 %v32
  %v111 = vunpack.c.l.b16 %v33
  %v112 = vunpack.c.l.b16 %v34
  %v113 = vunpack.c.l.b16 %v35
  %v114 = vunpack.c.l.b16 %v36
  %v115 = vunpack.c.l.b16 %v37
  %v116 = vunpack.c.l.b16 %v38
  %v117 = vunpack.c.l.b16 %v39
  %v118 = vunpack.c.l.b16 %v40
  %v119 = vunpack.c.l.b16 %v41
  %v120 = vunpack.c.l.b16 %v42
  %v121 = vunpack.c.l.b16 %v43
  %v122 = vunpack.c.l.b16 %v44
  %v123 = vunpack.c.l.b16 %v45
  %v124 = vpack.c.b16 %v93, %v92
  %v125 = vpack.c.b16 %v95, %v94
  %v126 = vpack.c.b16 %v97, %v96
  %v127 = vpack.c.b16 %v99, %v98
  %v128 = vpack.c.b16 %v101, %v100
  %v129 = vpack.c.b16 %v103, %v102
  %v130 = vpack.c.b16 %v105, %v104
  %v131 = vpack.c.b16 %v107, %v106
  %v132 = vpack.c.b16 %v109, %v108
  %v133 = vpack.c.b16 %v111, %v110
  %v134 = vpack.c.b16 %v113, %v112
  %v135 = vpack.c.b16 %v115, %v114
  %v136 = vpack.c.b16 %v117, %v116
  %v137 = vpack.c.b16 %v119, %v118
  %v138 = vpack.c.b16 %v121, %v120
  %v139 = vpack.c.b16 %v123, %v122
  %156 = vmatprep.subr.bf16.mxu0 0
  %157 = vmatpush1.bf16.msra.mxu0 %v124
  %158 = vmatprep.subr.bf16.mxu0 0
  %159 = vmatpush1.bf16.msra.mxu0 %v125
  %160 = vmatprep.subr.bf16.mxu0 0
  %161 = vmatpush1.bf16.msra.mxu0 %v126
  %162 = vmatprep.subr.bf16.mxu0 0
  %163 = vmatpush1.bf16.msra.mxu0 %v127
  %164 = vmatprep.subr.bf16.mxu0 0
  %165 = vmatpush1.bf16.msra.mxu0 %v128
  %166 = vmatprep.subr.bf16.mxu0 0
  %167 = vmatpush1.bf16.msra.mxu0 %v129
  %168 = vmatprep.subr.bf16.mxu0 0
  %169 = vmatpush1.bf16.msra.mxu0 %v130
  %170 = vmatprep.subr.bf16.mxu0 0
  %171 = vmatpush1.bf16.msra.mxu0 %v131
  %172 = vmatprep.subr.bf16.mxu0 0
  %173 = vmatpush1.bf16.msra.mxu0 %v132
  %174 = vmatprep.subr.bf16.mxu0 0
  %175 = vmatpush1.bf16.msra.mxu0 %v133
  %176 = vmatprep.subr.bf16.mxu0 0
  %177 = vmatpush1.bf16.msra.mxu0 %v134
  %178 = vmatprep.subr.bf16.mxu0 0
  %179 = vmatpush1.bf16.msra.mxu0 %v135
  %180 = vmatprep.subr.bf16.mxu0 0
  %181 = vmatpush1.bf16.msra.mxu0 %v136
  %182 = vmatprep.subr.bf16.mxu0 0
  %183 = vmatpush1.bf16.msra.mxu0 %v137
  %184 = vmatprep.subr.bf16.mxu0 0
  %185 = vmatpush1.bf16.msra.mxu0 %v138
  %186 = vmatprep.subr.bf16.mxu0 0
  %187 = vmatpush1.bf16.msra.mxu0 %v139
  %188 = vmatprep.mubr.bf16.mxu0 %v53
  %189 = vmatmul.mubr.bf16.gmra.mrb[0].mxu0 %v52
  %v190 = vpop.f32.mrb[0].mxu0
  %v191 = vadd.f32 0.0, %v190
  %v192 = vpop.f32.mrb[0].mxu0
  %v193 = vpop.f32.mrb[0].mxu0
  %v194 = vpop.f32.mrb[0].mxu0
  %195 = vdwg.mxu0
  %196 = vmatprep.subr.bf16.mxu0 0
  %197 = vmatpush1.bf16.msra.mxu0 %v124
  %198 = vmatprep.subr.bf16.mxu0 0
  %199 = vmatpush1.bf16.msra.mxu0 %v125
  %200 = vmatprep.subr.bf16.mxu0 0
  %201 = vmatpush1.bf16.msra.mxu0 %v126
  %202 = vmatprep.subr.bf16.mxu0 0
  %203 = vmatpush1.bf16.msra.mxu0 %v127
  %204 = vmatprep.subr.bf16.mxu0 0
  %205 = vmatpush1.bf16.msra.mxu0 %v128
  %206 = vmatprep.subr.bf16.mxu0 0
  %207 = vmatpush1.bf16.msra.mxu0 %v129
  %208 = vmatprep.subr.bf16.mxu0 0
  %209 = vmatpush1.bf16.msra.mxu0 %v130
  %210 = vmatprep.subr.bf16.mxu0 0
  %211 = vmatpush1.bf16.msra.mxu0 %v131
  %212 = vmatprep.subr.bf16.mxu0 0
  %213 = vmatpush1.bf16.msra.mxu0 %v132
  %214 = vmatprep.subr.bf16.mxu0 0
  %215 = vmatpush1.bf16.msra.mxu0 %v133
  %216 = vmatprep.subr.bf16.mxu0 0
  %217 = vmatpush1.bf16.msra.mxu0 %v134
  %218 = vmatprep.subr.bf16.mxu0 0
  %219 = vmatpush1.bf16.msra.mxu0 %v135
  %220 = vmatprep.subr.bf16.mxu0 0
  %221 = vmatpush1.bf16.msra.mxu0 %v136
  %222 = vmatprep.subr.bf16.mxu0 0
  %223 = vmatpush1.bf16.msra.mxu0 %v137
  %224 = vmatprep.subr.bf16.mxu0 0
  %225 = vmatpush1.bf16.msra.mxu0 %v138
  %226 = vmatprep.subr.bf16.mxu0 0
  %227 = vmatpush1.bf16.msra.mxu0 %v139
  %228 = vmatprep.mubr.bf16.mxu0 %v47
  %229 = vmatmul.mubr.bf16.gmra.mrb[0].mxu0 %v46
  %v230 = vpop.f32.mrb[0].mxu0
  %v231 = vadd.f32 %v191, %v230
  %v232 = vpop.f32.mrb[0].mxu0
  %v233 = vpop.f32.mrb[0].mxu0
  %v234 = vpop.f32.mrb[0].mxu0
  %235 = vdwg.mxu0
  %236 = vmatprep.subr.bf16.mxu0 0
  %237 = vmatpush1.bf16.msra.mxu0 %v124
  %238 = vmatprep.subr.bf16.mxu0 0
  %239 = vmatpush1.bf16.msra.mxu0 %v125
  %240 = vmatprep.subr.bf16.mxu0 0
  %241 = vmatpush1.bf16.msra.mxu0 %v126
  %242 = vmatprep.subr.bf16.mxu0 0
  %243 = vmatpush1.bf16.msra.mxu0 %v127
  %244 = vmatprep.subr.bf16.mxu0 0
  %245 = vmatpush1.bf16.msra.mxu0 %v128
  %246 = vmatprep.subr.bf16.mxu0 0
  %247 = vmatpush1.bf16.msra.mxu0 %v129
  %248 = vmatprep.subr.bf16.mxu0 0
  %249 = vmatpush1.bf16.msra.mxu0 %v130
  %250 = vmatprep.subr.bf16.mxu0 0
  %251 = vmatpush1.bf16.msra.mxu0 %v131
  %252 = vmatprep.subr.bf16.mxu0 0
  %253 = vmatpush1.bf16.msra.mxu0 %v132
  %254 = vmatprep.subr.bf16.mxu0 0
  %255 = vmatpush1.bf16.msra.mxu0 %v133
  %256 = vmatprep.subr.bf16.mxu0 0
  %257 = vmatpush1.bf16.msra.mxu0 %v134
  %258 = vmatprep.subr.bf16.mxu0 0
  %259 = vmatpush1.bf16.msra.mxu0 %v135
  %260 = vmatprep.subr.bf16.mxu0 0
  %261 = vmatpush1.bf16.msra.mxu0 %v136
  %262 = vmatprep.subr.bf16.mxu0 0
  %263 = vmatpush1.bf16.msra.mxu0 %v137
  %264 = vmatprep.subr.bf16.mxu0 0
  %265 = vmatpush1.bf16.msra.mxu0 %v138
  %266 = vmatprep.subr.bf16.mxu0 0
  %267 = vmatpush1.bf16.msra.mxu0 %v139
  %268 = vmatprep.mubr.bf16.mxu0 %v59
  %269 = vmatmul.mubr.bf16.gmra.mrb[0].mxu0 %v58
  %v270 = vpop.f32.mrb[0].mxu0
  %v271 = vadd.f32 0.0, %v270
  %v272 = vpop.f32.mrb[0].mxu0
  %v273 = vpop.f32.mrb[0].mxu0
  %v274 = vpop.f32.mrb[0].mxu0
  %275 = vdwg.mxu0
  %v276 = vadd.f32 %v231, %v271
  %vm277 = vcmask 523264
  %278 = vst.msk [vmem:[%s2] sm:$0xff] %vm277, %v276
  // Predicated region
  $region10: #{transition_forward.1} parent=0 // pred_check
    _
  $region11: #{transition_forward.1} parent=0 // pred_check_branch
    %280 = sbr.rel (0) target = $region13
  $region12: #{transition_forward.1} parent=0 // pred_region
    _
  $region13: #{transition_forward.1} parent=0 // pred_fallthru
    _
  // Predicated region
  $region14: #{transition_forward.1} parent=0 // pred_check
    _
  $region15: #{transition_forward.1} parent=0 // pred_check_branch
    %282 = sbr.rel (0) target = $region17
  $region16: #{transition_forward.1} parent=0 // pred_region
    _
  $region17: #{transition_forward.1} parent=0 // pred_fallthru
    _

</llo_original>
